<compile_context>
chip_gen: v5e
topology: v5e:2x2
jax: 0.10.0
libtpu: 0.0.40
codegen_flags: <defaults>
</compile_context>

<pallas_src>
import jax
import jax.numpy as jnp
from jax.experimental import pallas as pl
from jax.experimental.pallas import tpu as pltpu


def _cdiv(a, b):
    return -(-a // b)


def _round_up(a, m):
    return _cdiv(a, m) * m


def _mse_trig_kernel(pred_ref, tgt_ref, cos_ref, sin_ref, mse_out_ref, trig_out_ref):
    # ---- MSE stream: (TILE_R, 128) lane-dense blocks of flattened pred/tgt ----
    diff = pred_ref[...] - tgt_ref[...]
    sq = diff * diff
    tr = sq.shape[0]
    # Fold to an (8, 128) partial-sum vreg block. The reshape splits exactly on
    # (8, 128) tile boundaries (layout-preserving), so this is pure vector adds.
    mse_out_ref[...] = jnp.sum(sq.reshape(tr // 8, 8, 128), axis=0)

    # ---- Trig constraint stream: lane-dense cos / sin slabs -------------------
    c = cos_ref[...]
    s = sin_ref[...]
    dev = jnp.abs(1.0 - jnp.sqrt(c * c + s * s))
    tc = dev.shape[0]
    trig_out_ref[...] = jnp.sum(dev.reshape(tc // 8, 8, 128), axis=0)


def mse_with_trig_constraint(prediction, target, trig_lagrangian=1.0, *, mse_tile_rows=2048):
    """Pallas TPU implementation of MSEWithTrigConstraint.forward.

    prediction, target: (B, F) arrays; last two prediction columns are (cos, sin).
    """
    assert prediction.shape == target.shape
    assert prediction.ndim == 2 and prediction.shape[1] >= 2, "expected (batch, features>=2)"
    B, F = prediction.shape
    prediction = prediction.astype(jnp.float32)
    target = target.astype(jnp.float32)

    # ---- lane-dense (rows, 128) layouts ------------------------------------
    n = B * F
    r = _cdiv(n, 128)       # rows needed for the flattened MSE stream
    cr = _cdiv(B, 128)      # rows needed for the cos/sin stream

    # Grid sized off the dominant (MSE) stream; per-step block rows are
    # multiples of 8 so the (8, 128) block constraint always holds.
    g = max(1, _cdiv(r, mse_tile_rows))
    tile_r = _round_up(_cdiv(r, g), 8)
    r_pad = tile_r * g
    tile_cr = _round_up(_cdiv(cr, g), 8)
    cr_pad = tile_cr * g

    pred_flat = prediction.reshape(-1)
    tgt_flat = target.reshape(-1)
    pad_n = r_pad * 128 - n
    if pad_n:
        pred_flat = jnp.pad(pred_flat, (0, pad_n))   # diff = 0 in padding
        tgt_flat = jnp.pad(tgt_flat, (0, pad_n))
    pred2d = pred_flat.reshape(r_pad, 128)
    tgt2d = tgt_flat.reshape(r_pad, 128)

    cos_flat = prediction[:, F - 2]
    sin_flat = prediction[:, F - 1]
    pad_b = cr_pad * 128 - B
    if pad_b:
        # cos=1, sin=0 in padding -> norm == 1 -> |1 - norm| == 0 contribution.
        cos_flat = jnp.pad(cos_flat, (0, pad_b), constant_values=1.0)
        sin_flat = jnp.pad(sin_flat, (0, pad_b), constant_values=0.0)
    cos2d = cos_flat.reshape(cr_pad, 128)
    sin2d = sin_flat.reshape(cr_pad, 128)

    cost = pl.CostEstimate(
        flops=3 * r_pad * 128 + 5 * cr_pad * 128,
        transcendentals=cr_pad * 128,
        bytes_accessed=4 * (2 * r_pad * 128 + 2 * cr_pad * 128 + 2 * g * 8 * 128),
    )

    mse_part, trig_part = pl.pallas_call(
        _mse_trig_kernel,
        out_shape=(
            jax.ShapeDtypeStruct((g * 8, 128), jnp.float32),
            jax.ShapeDtypeStruct((g * 8, 128), jnp.float32),
        ),
        grid=(g,),
        in_specs=[
            pl.BlockSpec((tile_r, 128), lambda i: (i, 0)),
            pl.BlockSpec((tile_r, 128), lambda i: (i, 0)),
            pl.BlockSpec((tile_cr, 128), lambda i: (i, 0)),
            pl.BlockSpec((tile_cr, 128), lambda i: (i, 0)),
        ],
        out_specs=(
            pl.BlockSpec((8, 128), lambda i: (i, 0)),
            pl.BlockSpec((8, 128), lambda i: (i, 0)),
        ),
        compiler_params=pltpu.CompilerParams(dimension_semantics=("parallel",)),
        cost_estimate=cost,
    )(pred2d, tgt2d, cos2d, sin2d)

    # Final scalar combine (tiny) in JAX: global sums + exact mean scaling.
    mse = jnp.sum(mse_part) / jnp.float32(B * F)
    constraint = jnp.sum(trig_part) / jnp.float32(B)
    return mse + jnp.float32(trig_lagrangian) * constraint


def _reference(prediction, target, trig_lagrangian=1.0):
    # Pure-JAX reference mirroring the PyTorch module.
    mse = jnp.mean((prediction - target) ** 2)
    cos_v = prediction[:, -2]
    sin_v = prediction[:, -1]
    norm = jnp.sqrt(cos_v**2 + sin_v**2)
    return mse + trig_lagrangian * jnp.mean(jnp.abs(1.0 - norm))


if __name__ == "__main__":
    key = jax.random.PRNGKey(0)

    # Case 1: small batch of feature vectors whose last two entries are (cos, sin).
    B, F = 8, 32
    k_pred, k_tgt, k2_pred, k2_tgt = jax.random.split(key, 4)
    prediction = jax.random.normal(k_pred, (B, F), dtype=jnp.float32)
    target = jax.random.normal(k_tgt, (B, F), dtype=jnp.float32)
    loss = jax.block_until_ready(mse_with_trig_constraint(prediction, target, 1.0))
    ref = _reference(prediction, target, 1.0)
    assert jnp.allclose(loss, ref, rtol=1e-5, atol=1e-5), (loss, ref)

    # Case 2: non-aligned batch + tiny tile to exercise the multi-block
    # (grid > 1) and padding/masking paths.
    B2, F2 = 100, 32
    prediction2 = jax.random.normal(k2_pred, (B2, F2), dtype=jnp.float32)
    target2 = jax.random.normal(k2_tgt, (B2, F2), dtype=jnp.float32)
    loss2 = jax.block_until_ready(
        mse_with_trig_constraint(prediction2, target2, 0.5, mse_tile_rows=8)
    )
    ref2 = _reference(prediction2, target2, 0.5)
    assert jnp.allclose(loss2, ref2, rtol=1e-5, atol=1e-5), (loss2, ref2)

    print("KERNEL_OK")
</pallas_src>

<mosaic_0001>
module attributes {stable_mosaic.version = 11 : i64} {
  func.func @_mse_trig_kernel(%arg0: i32, %arg1: memref<8x128xf32, #tpu.memory_space<vmem>>, %arg2: memref<8x128xf32, #tpu.memory_space<vmem>>, %arg3: memref<8x128xf32, #tpu.memory_space<vmem>>, %arg4: memref<8x128xf32, #tpu.memory_space<vmem>>, %arg5: memref<8x128xf32, #tpu.memory_space<vmem>>, %arg6: memref<8x128xf32, #tpu.memory_space<vmem>>) attributes {dimension_semantics = [#tpu.dimension_semantics<parallel>], iteration_bounds = array<i64: 1>, scalar_prefetch = 0 : i64, scratch_operands = 0 : i64, tpu.core_type = #tpu.core_type<tc>, window_params = [{transform_indices = @transform_0, window_bounds = array<i64: 8, 128>}, {transform_indices = @transform_1, window_bounds = array<i64: 8, 128>}, {transform_indices = @transform_2, window_bounds = array<i64: 8, 128>}, {transform_indices = @transform_3, window_bounds = array<i64: 8, 128>}, {transform_indices = @transform_4, window_bounds = array<i64: 8, 128>}, {transform_indices = @transform_5, window_bounds = array<i64: 8, 128>}]} {
    %c0 = arith.constant 0 : index
    %c0_0 = arith.constant 0 : index
    %0 = vector.load %arg1[%c0, %c0_0] : memref<8x128xf32, #tpu.memory_space<vmem>>, vector<8x128xf32>
    %c0_1 = arith.constant 0 : index
    %c0_2 = arith.constant 0 : index
    %1 = vector.load %arg2[%c0_1, %c0_2] : memref<8x128xf32, #tpu.memory_space<vmem>>, vector<8x128xf32>
    %2 = arith.subf %0, %1 : vector<8x128xf32>
    %3 = arith.mulf %2, %2 : vector<8x128xf32>
    %4 = vector.shape_cast %3 : vector<8x128xf32> to vector<1x8x128xf32>
    %cst = arith.constant dense<0.000000e+00> : vector<8x128xf32>
    %5 = vector.multi_reduction <add>, %4, %cst [0] : vector<1x8x128xf32> to vector<8x128xf32>
    %c0_3 = arith.constant 0 : index
    %c0_4 = arith.constant 0 : index
    %6 = vector.load %arg5[%c0_3, %c0_4] : memref<8x128xf32, #tpu.memory_space<vmem>>, vector<8x128xf32>
    tpu.vector_store %arg5[%c0_3, %c0_4], %5 {strides = array<i32>} : memref<8x128xf32, #tpu.memory_space<vmem>>, vector<8x128xf32>,
    %c0_5 = arith.constant 0 : index
    %c0_6 = arith.constant 0 : index
    %7 = vector.load %arg3[%c0_5, %c0_6] : memref<8x128xf32, #tpu.memory_space<vmem>>, vector<8x128xf32>
    %c0_7 = arith.constant 0 : index
    %c0_8 = arith.constant 0 : index
    %8 = vector.load %arg4[%c0_7, %c0_8] : memref<8x128xf32, #tpu.memory_space<vmem>>, vector<8x128xf32>
    %9 = arith.mulf %7, %7 : vector<8x128xf32>
    %10 = arith.mulf %8, %8 : vector<8x128xf32>
    %11 = arith.addf %9, %10 : vector<8x128xf32>
    %12 = math.sqrt %11 : vector<8x128xf32>
    %cst_9 = arith.constant 1.000000e+00 : f32
    %13 = vector.broadcast %cst_9 : f32 to vector<8x128xf32>
    %14 = arith.subf %13, %12 : vector<8x128xf32>
    %15 = math.absf %14 : vector<8x128xf32>
    %16 = vector.shape_cast %15 : vector<8x128xf32> to vector<1x8x128xf32>
    %cst_10 = arith.constant dense<0.000000e+00> : vector<8x128xf32>
    %17 = vector.multi_reduction <add>, %16, %cst_10 [0] : vector<1x8x128xf32> to vector<8x128xf32>
    %c0_11 = arith.constant 0 : index
    %c0_12 = arith.constant 0 : index
    %18 = vector.load %arg6[%c0_11, %c0_12] : memref<8x128xf32, #tpu.memory_space<vmem>>, vector<8x128xf32>
    tpu.vector_store %arg6[%c0_11, %c0_12], %17 {strides = array<i32>} : memref<8x128xf32, #tpu.memory_space<vmem>>, vector<8x128xf32>,
    return
  }
  func.func @transform_0(%arg0: i32) -> (i32, i32) {
    %c0_i32 = arith.constant 0 : i32
    %c0_i32_0 = arith.constant 0 : i32
    return %arg0, %c0_i32 : i32, i32
  }
  func.func @transform_1(%arg0: i32) -> (i32, i32) {
    %c0_i32 = arith.constant 0 : i32
    %c0_i32_0 = arith.constant 0 : i32
    return %arg0, %c0_i32 : i32, i32
  }
  func.func @transform_2(%arg0: i32) -> (i32, i32) {
    %c0_i32 = arith.constant 0 : i32
    %c0_i32_0 = arith.constant 0 : i32
    return %arg0, %c0_i32 : i32, i32
  }
  func.func @transform_3(%arg0: i32) -> (i32, i32) {
    %c0_i32 = arith.constant 0 : i32
    %c0_i32_0 = arith.constant 0 : i32
    return %arg0, %c0_i32 : i32, i32
  }
  func.func @transform_4(%arg0: i32) -> (i32, i32) {
    %c0_i32 = arith.constant 0 : i32
    %c0_i32_0 = arith.constant 0 : i32
    return %arg0, %c0_i32 : i32, i32
  }
  func.func @transform_5(%arg0: i32) -> (i32, i32) {
    %c0_i32 = arith.constant 0 : i32
    %c0_i32_0 = arith.constant 0 : i32
    return %arg0, %c0_i32 : i32, i32
  }
}

</mosaic_0001>

<llo_original>
// kernel: tpu_custom_call.1
$region0: #{tpu_custom_call.1}
  #allocation0 [shape = 'u32[]', space=smem, size = 0x4, offset = 0x4, fixed_abs, tag = 'smem constant byte address 0x4 - core index']
  #allocation1 [shape = 'u32[72,128]{1,0:T(1,128)}', space=vmem, size = 0x9000, scoped, tag = 'internal scratch']
  %s0 = inlined_call_operand.hbm [shape: f32[8,128], index: 0, kind: input, shape index: {}]
  %s1 = inlined_call_operand.hbm [shape: f32[8,128], index: 1, kind: input, shape index: {}]
  %s2 = inlined_call_operand.hbm [shape: f32[8,128], index: 2, kind: input, shape index: {}]
  %s3 = inlined_call_operand.hbm [shape: f32[8,128], index: 3, kind: input, shape index: {}]
  %s4 = inlined_call_operand.hbm [shape: f32[8,128], index: 4, kind: output, shape index: {0}]
  %s5 = inlined_call_operand.hbm [shape: f32[8,128], index: 5, kind: output, shape index: {1}]
  %6 = xla_tuple %s4, %s5
  %s7 = sld [smem:[#allocation0]]
  $region50: #{tpu_custom_call.1} parent=0
    _
  %s9 = ssub.s32 1, %s7
  %s10 = scalar_select 0, %s9, %s7
  $region1: #{tpu_custom_call.1} parent=0
    #allocation2 [shape = 'u8[4096]{0}', space=vmem, size = 0x1000, scoped, tag = 'input window, operand 0, single buffered']
    #allocation3 [shape = 's32[1]{0}', space=sflag, size = 0x4, scoped, tag = 'scoped memory for tpu_custom_call.1']
    #allocation4 [shape = 's32[1]{0}', space=sflag, size = 0x4, scoped, tag = 'scoped memory for tpu_custom_call.1']
    #allocation5 [shape = 'u8[4096]{0}', space=vmem, size = 0x1000, scoped, tag = 'input window, operand 1, single buffered']
    #allocation6 [shape = 's32[1]{0}', space=sflag, size = 0x4, scoped, tag = 'scoped memory for tpu_custom_call.1']
    #allocation7 [shape = 'u8[4096]{0}', space=vmem, size = 0x1000, scoped, tag = 'input window, operand 2, single buffered']
    #allocation8 [shape = 'u8[4096]{0}', space=vmem, size = 0x1000, scoped, tag = 'input window, operand 3, single buffered']
    #allocation9 [shape = 's32[1]{0}', space=sflag, size = 0x4, scoped, tag = 'scoped memory for tpu_custom_call.1']
    #allocation10 [shape = 'u8[4096]{0}', space=vmem, size = 0x1000, scoped, tag = 'output window, operand 0, single buffered']
    #allocation11 [shape = 'u8[4096]{0}', space=vmem, size = 0x1000, scoped, tag = 'output window, operand 1, single buffered']
    #allocation12 [shape = 's32[1]{0}', space=sflag, size = 0x4, scoped, tag = 'scoped memory for tpu_custom_call.1']
    %11 = vsyncpa [#allocation3], 0
    %12 = vsyncpa [#allocation6], 0
    %13 = vsyncpa [#allocation9], 0
    %14 = vsyncpa [#allocation4], 0
    %15 = vsyncpa [#allocation12], 0
    // Predicated region
    $region2: #{tpu_custom_call.1} parent=1 // pred_check
      _
    $region3: #{tpu_custom_call.1} parent=1 // pred_check_branch
      %17 = sbr.rel (0) target = $region5
    $region4: #{tpu_custom_call.1} parent=1 // pred_region
      %19 = vsyncadd [#allocation3], 0
      %s21 = sshll.u32 %s0, 4
      %s22 = int_to_ptr.hbm [resolvable:$true] %s21
      %s23 = sshll.u32 [#allocation2], 4
      %s24 = int_to_ptr.vmem [resolvable:$true] %s23
      %26 = dma.hbm_to_vmem [thread:$0]  %s22, 128, %s24, [#allocation3]
    $region5: #{tpu_custom_call.1} parent=1 // pred_fallthru
      _
    // Predicated region
    $region6: #{tpu_custom_call.1} parent=1 // pred_check
      _
    $region7: #{tpu_custom_call.1} parent=1 // pred_check_branch
      %28 = sbr.rel (0) target = $region9
    $region8: #{tpu_custom_call.1} parent=1 // pred_region
      %30 = vsyncadd [#allocation6], 0
      %s32 = sshll.u32 %s1, 4
      %s33 = int_to_ptr.hbm [resolvable:$true] %s32
      %s34 = sshll.u32 [#allocation5], 4
      %s35 = int_to_ptr.vmem [resolvable:$true] %s34
      %37 = dma.hbm_to_vmem [thread:$0]  %s33, 128, %s35, [#allocation6]
    $region9: #{tpu_custom_call.1} parent=1 // pred_fallthru
      _
    // Predicated region
    $region10: #{tpu_custom_call.1} parent=1 // pred_check
      _
    $region11: #{tpu_custom_call.1} parent=1 // pred_check_branch
      %39 = sbr.rel (0) target = $region13
    $region12: #{tpu_custom_call.1} parent=1 // pred_region
      %41 = vsyncadd [#allocation6], 0
      %s43 = sshll.u32 %s2, 4
      %s44 = int_to_ptr.hbm [resolvable:$true] %s43
      %s45 = sshll.u32 [#allocation7], 4
      %s46 = int_to_ptr.vmem [resolvable:$true] %s45
      %48 = dma.hbm_to_vmem [thread:$0]  %s44, 128, %s46, [#allocation6]
    $region13: #{tpu_custom_call.1} parent=1 // pred_fallthru
      _
    // Predicated region
    $region14: #{tpu_custom_call.1} parent=1 // pred_check
      _
    $region15: #{tpu_custom_call.1} parent=1 // pred_check_branch
      %50 = sbr.rel (0) target = $region17
    $region16: #{tpu_custom_call.1} parent=1 // pred_region
      %52 = vsyncadd [#allocation9], 0
      %s54 = sshll.u32 %s3, 4
      %s55 = int_to_ptr.hbm [resolvable:$true] %s54
      %s56 = sshll.u32 [#allocation8], 4
      %s57 = int_to_ptr.vmem [resolvable:$true] %s56
      %59 = dma.hbm_to_vmem [thread:$0]  %s55, 128, %s57, [#allocation9]
    $region17: #{tpu_custom_call.1} parent=1 // pred_fallthru
      _
    // Predicated region
    $region18: #{tpu_custom_call.1} parent=1 // pred_check
      _
    $region19: #{tpu_custom_call.1} parent=1 // pred_check_branch
      %61 = sbr.rel (0) target = $region21
    $region20: #{tpu_custom_call.1} parent=1 // pred_region
      %63 = dma.done [#allocation3], 128
    $region21: #{tpu_custom_call.1} parent=1 // pred_fallthru
      _
    // Predicated region
    $region22: #{tpu_custom_call.1} parent=1 // pred_check
      _
    $region23: #{tpu_custom_call.1} parent=1 // pred_check_branch
      %65 = sbr.rel (0) target = $region25
    $region24: #{tpu_custom_call.1} parent=1 // pred_region
      %67 = dma.done [#allocation6], 128
    $region25: #{tpu_custom_call.1} parent=1 // pred_fallthru
      _
    // Predicated region
    $region26: #{tpu_custom_call.1} parent=1 // pred_check
      _
    $region27: #{tpu_custom_call.1} parent=1 // pred_check_branch
      %69 = sbr.rel (0) target = $region29
    $region28: #{tpu_custom_call.1} parent=1 // pred_region
      %71 = dma.done [#allocation6], 128
    $region29: #{tpu_custom_call.1} parent=1 // pred_fallthru
      _
    // Predicated region
    $region30: #{tpu_custom_call.1} parent=1 // pred_check
      _
    $region31: #{tpu_custom_call.1} parent=1 // pred_check_branch
      %73 = sbr.rel (0) target = $region33
    $region32: #{tpu_custom_call.1} parent=1 // pred_region
      %75 = dma.done [#allocation9], 128
    $region33: #{tpu_custom_call.1} parent=1 // pred_fallthru
      _
    %v76 = vld [vmem:[#allocation2] sm:$0xff]
    %v77 = vld [vmem:[#allocation5] sm:$0xff]
    %v78 = vsub.f32 %v76, %v77
    %v79 = vmul.f32 %v78, %v78
    %v80 = vadd.f32 %v79, 0.0
    %81 = vst [vmem:[#allocation10] sm:$0xff] %v80
    %v82 = vld [vmem:[#allocation7] sm:$0xff]
    %v83 = vld [vmem:[#allocation8] sm:$0xff]
    %v84 = vmul.f32 %v82, %v82
    %v85 = vmul.f32 %v83, %v83
    %v86 = vadd.f32 %v84, %v85
    %v87 = vrsqrt.pop %v86
    %v88 = vmul.f32 %v87, %v86
    %v89 = vmul.f32 %v88, %v87
    %v90 = vmul.f32 0.5, %v89
    %v91 = vsub.f32 1.5, %v90
    %v92 = vmul.f32 %v87, %v91
    %v93 = vmul.f32 %v86, %v92
    %vm94 = vcmp.eq.f32.partialorder %v86, inf
    %v95 = vsel %vm94, %v86, %v93
    %vm96 = vcmp.eq.f32.partialorder %v86, 0.0
    %v97 = vand.u32 %v86, 2147483648
    %v98 = vsel %vm96, %v97, %v95
    %v99 = vsub.f32 1.0, %v98
    %v100 = vand.u32 2147483647, %v99
    %v101 = vadd.f32 %v100, 0.0
    %102 = vst [vmem:[#allocation11] sm:$0xff] %v101
    // Predicated region
    $region34: #{tpu_custom_call.1} parent=1 // pred_check
      _
    $region35: #{tpu_custom_call.1} parent=1 // pred_check_branch
      %104 = sbr.rel (0) target = $region37
    $region36: #{tpu_custom_call.1} parent=1 // pred_region
      %106 = vsyncadd [#allocation4], 0
      %s108 = sshll.u32 [#allocation10], 4
      %s109 = int_to_ptr.vmem [resolvable:$true] %s108
      %s110 = sshll.u32 %s4, 4
      %s111 = int_to_ptr.hbm [resolvable:$true] %s110
      %113 = dma.vmem_to_hbm [thread:$0]  %s109, 128, %s111, [#allocation4]
    $region37: #{tpu_custom_call.1} parent=1 // pred_fallthru
      _
    // Predicated region
    $region38: #{tpu_custom_call.1} parent=1 // pred_check
      _
    $region39: #{tpu_custom_call.1} parent=1 // pred_check_branch
      %115 = sbr.rel (0) target = $region41
    $region40: #{tpu_custom_call.1} parent=1 // pred_region
      %117 = vsyncadd [#allocation12], 0
      %s119 = sshll.u32 [#allocation11], 4
      %s120 = int_to_ptr.vmem [resolvable:$true] %s119
      %s121 = sshll.u32 %s5, 4
      %s122 = int_to_ptr.hbm [resolvable:$true] %s121
      %124 = dma.vmem_to_hbm [thread:$0]  %s120, 128, %s122, [#allocation12]
    $region41: #{tpu_custom_call.1} parent=1 // pred_fallthru
      _
    // Predicated region
    $region42: #{tpu_custom_call.1} parent=1 // pred_check
      _
    $region43: #{tpu_custom_call.1} parent=1 // pred_check_branch
      %126 = sbr.rel (0) target = $region45
    $region44: #{tpu_custom_call.1} parent=1 // pred_region
      %128 = dma.done [#allocation4], 128
    $region45: #{tpu_custom_call.1} parent=1 // pred_fallthru
      _
    // Predicated region
    $region46: #{tpu_custom_call.1} parent=1 // pred_check
      _
    $region47: #{tpu_custom_call.1} parent=1 // pred_check_branch
      %130 = sbr.rel (0) target = $region49
    $region48: #{tpu_custom_call.1} parent=1 // pred_region
      %132 = dma.done [#allocation12], 128
    $region49: #{tpu_custom_call.1} parent=1 // pred_fallthru
      _
    %133 = vsyncpa [#allocation3], 1
    %134 = vsyncpa [#allocation6], 1
    %135 = vsyncpa [#allocation9], 1
    %136 = vsyncpa [#allocation4], 1
    %137 = vsyncpa [#allocation12], 1

</llo_original>
